<compile_context>
chip_gen: v7x
topology: tpu7x:2x2x1
jax: 0.10.0
libtpu: 0.0.40
codegen_flags: <defaults>
</compile_context>

<pallas_src>
import jax
import jax.numpy as jnp
from jax import lax
from jax.experimental import pallas as pl
from jax.experimental.pallas import tpu as pltpu


def _add_linear_kernel(w_ref, x_ref, other_ref, out_ref):
    # Feature-major tiles:
    #   w_ref:     (F_out, F_in)    -- tiny, VMEM-resident
    #   x_ref:     (F_in,  tile_b)
    #   other_ref: (F_in,  tile_b)
    #   out_ref:   (F_out, tile_b)  -- lane-dense output block
    s = x_ref[...] + other_ref[...]                       # (F_in, tile_b)
    out_ref[...] = lax.dot_general(
        w_ref[...], s,
        dimension_numbers=(((1,), (0,)), ((), ())),       # W.F_in x s.F_in
        preferred_element_type=jnp.float32,
    ).astype(out_ref.dtype)


def add_linear(x1, other, weight, *, tile_b=16384):
    """Computes (x1 + other) @ weight.T with a single Pallas kernel.

    x1, other: (B, F_in) float32
    weight:    (F_out, F_in) float32
    returns:   (B, F_out) float32
    """
    B, F_in = x1.shape
    F_out = weight.shape[0]

    # Layout plumbing (XLA side): present activations feature-major so the
    # batch axis maps to the 128-wide lane dimension inside the kernel.
    x_t = x1.T                                            # (F_in, B)
    o_t = other.T                                         # (F_in, B)

    bytes_accessed = 4 * (2 * B * F_in + B * F_out + F_in * F_out)
    cost = pl.CostEstimate(
        flops=2 * B * F_in * F_out + B * F_in,
        transcendentals=0,
        bytes_accessed=bytes_accessed,
    )

    if B <= tile_b:
        # Small-batch path: one full-array block per operand, no grid, no
        # pipeline machinery.  Full-array blocks sidestep the (8,128)
        # divisibility rule; a (16, tile_b) f32 slab is well under VMEM.
        out_t = pl.pallas_call(
            _add_linear_kernel,
            out_shape=jax.ShapeDtypeStruct((F_out, B), x1.dtype),
            in_specs=[
                pl.BlockSpec(memory_space=pltpu.MemorySpace.VMEM),
                pl.BlockSpec(memory_space=pltpu.MemorySpace.VMEM),
                pl.BlockSpec(memory_space=pltpu.MemorySpace.VMEM),
            ],
            out_specs=pl.BlockSpec(memory_space=pltpu.MemorySpace.VMEM),
            cost_estimate=cost,
        )(weight, x_t, o_t)
    else:
        # Large-batch path: tile the lane (batch) axis with a cdiv grid so
        # any B works; weight block is constant -> stays VMEM resident.
        # B > tile_b guarantees >= 2 grid steps, so the "parallel" axis can
        # actually feed both TensorCores on v7x.
        grid = (pl.cdiv(B, tile_b),)
        out_t = pl.pallas_call(
            _add_linear_kernel,
            out_shape=jax.ShapeDtypeStruct((F_out, B), x1.dtype),
            grid=grid,
            in_specs=[
                pl.BlockSpec((F_out, F_in), lambda i: (0, 0)),
                pl.BlockSpec((F_in, tile_b), lambda i: (0, i)),
                pl.BlockSpec((F_in, tile_b), lambda i: (0, i)),
            ],
            out_specs=pl.BlockSpec((F_out, tile_b), lambda i: (0, i)),
            compiler_params=pltpu.CompilerParams(
                dimension_semantics=("parallel",),
            ),
            cost_estimate=cost,
        )(weight, x_t, o_t)

    return out_t.T                                        # (B, F_out)


if __name__ == "__main__":
    key = jax.random.PRNGKey(0)
    k_x, k_other, k_w = jax.random.split(key, 3)

    B, F = 8, 10  # batch=8, features=10 (Linear(10, 10, bias=False))

    x1 = jax.random.normal(k_x, (B, F), dtype=jnp.float32)
    other = jax.random.normal(k_other, (B, F), dtype=jnp.float32)
    # Deterministic weight init mimicking nn.Linear's uniform(-1/sqrt(F), 1/sqrt(F))
    bound = 1.0 / (F ** 0.5)
    weight = jax.random.uniform(
        k_w, (F, F), minval=-bound, maxval=bound, dtype=jnp.float32
    )

    # Small-batch (no-grid) path.
    out = add_linear(x1, other, weight)
    jax.block_until_ready(out)
    ref = (x1 + other) @ weight.T
    assert out.shape == (B, F)
    assert jnp.allclose(out, ref, atol=1e-5, rtol=1e-5)

    # Tiled grid path with a ragged batch (exercises cdiv grid + boundary
    # masking on the lane axis).
    B2 = 1300
    k_x2, k_o2 = jax.random.split(jax.random.PRNGKey(1), 2)
    x2 = jax.random.normal(k_x2, (B2, F), dtype=jnp.float32)
    o2 = jax.random.normal(k_o2, (B2, F), dtype=jnp.float32)
    out2 = add_linear(x2, o2, weight, tile_b=512)
    jax.block_until_ready(out2)
    ref2 = (x2 + o2) @ weight.T
    assert out2.shape == (B2, F)
    assert jnp.allclose(out2, ref2, atol=1e-5, rtol=1e-5)

    print("KERNEL_OK")
</pallas_src>

<mosaic_0001>
module attributes {stable_mosaic.version = 11 : i64} {
  func.func @_add_linear_kernel(%arg0: memref<10x10xf32, #tpu.memory_space<vmem>>, %arg1: memref<10x8xf32, #tpu.memory_space<vmem>>, %arg2: memref<10x8xf32, #tpu.memory_space<vmem>>, %arg3: memref<10x8xf32, #tpu.memory_space<vmem>>) attributes {dimension_semantics = [], scalar_prefetch = 0 : i64, scratch_operands = 0 : i64, tpu.core_type = #tpu.core_type<tc>} {
    %c0 = arith.constant 0 : index
    %c0_0 = arith.constant 0 : index
    %0 = vector.load %arg1[%c0, %c0_0] : memref<10x8xf32, #tpu.memory_space<vmem>>, vector<10x8xf32>
    %c0_1 = arith.constant 0 : index
    %c0_2 = arith.constant 0 : index
    %1 = vector.load %arg2[%c0_1, %c0_2] : memref<10x8xf32, #tpu.memory_space<vmem>>, vector<10x8xf32>
    %2 = arith.addf %0, %1 : vector<10x8xf32>
    %c0_3 = arith.constant 0 : index
    %c0_4 = arith.constant 0 : index
    %3 = vector.load %arg0[%c0_3, %c0_4] : memref<10x10xf32, #tpu.memory_space<vmem>>, vector<10x10xf32>
    %cst = arith.constant dense<0.000000e+00> : vector<10x8xf32>
    %4 = tpu.matmul %3, %2, %cst {dimension_numbers = #tpu.dot_dimension_numbers<[1], [0], [0], [1], [0, 0, 1, 1], [], []>} : vector<10x10xf32>, vector<10x8xf32>, vector<10x8xf32> -> vector<10x8xf32>
    %c0_5 = arith.constant 0 : index
    %c0_6 = arith.constant 0 : index
    %5 = vector.load %arg3[%c0_5, %c0_6] : memref<10x8xf32, #tpu.memory_space<vmem>>, vector<10x8xf32>
    tpu.vector_store %arg3[%c0_5, %c0_6], %4 {strides = array<i32>} : memref<10x8xf32, #tpu.memory_space<vmem>>, vector<10x8xf32>,
    return
  }
}

</mosaic_0001>

<llo_original>
// kernel: tpu_custom_call.1
$region0: #{tpu_custom_call.1}
  #allocation0 [shape = 'u32[]', space=smem, size = 0x4, offset = 0x4, fixed_abs, tag = 'smem constant byte address 0x4 - core index']
  #allocation1 [shape = 'u32[144,128]{1,0:T(1,128)}', space=vmem, size = 0x12000, scoped, tag = 'internal scratch']
  %s0 = inlined_call_operand.vmem [shape: f32[10,10], index: 0, kind: input, shape index: {}]
  %s1 = inlined_call_operand.vmem [shape: f32[10,8], index: 1, kind: input, shape index: {}]
  %s2 = inlined_call_operand.vmem [shape: f32[10,8], index: 2, kind: input, shape index: {}]
  %s3 = inlined_call_operand.vmem [shape: f32[10,8], index: 3, kind: output, shape index: {}]
  %s4 = sld [smem:[#allocation0]]
  $region22: #{tpu_custom_call.1} parent=0
    _
  %s6 = ssub.s32 1, %s4
  %s7 = scalar_select 0, %s6, %s4
  // Predicated region
  $region2: #{tpu_custom_call.1} parent=0 // pred_check
    _
  $region3: #{tpu_custom_call.1} parent=0 // pred_check_branch
    %9 = sbr.rel (0) target = $region5
  $region4: #{tpu_custom_call.1} parent=0 // pred_region
    _
  $region5: #{tpu_custom_call.1} parent=0 // pred_fallthru
    _
  // Predicated region
  $region6: #{tpu_custom_call.1} parent=0 // pred_check
    _
  $region7: #{tpu_custom_call.1} parent=0 // pred_check_branch
    %11 = sbr.rel (0) target = $region9
  $region8: #{tpu_custom_call.1} parent=0 // pred_region
    _
  $region9: #{tpu_custom_call.1} parent=0 // pred_fallthru
    _
  // Predicated region
  $region10: #{tpu_custom_call.1} parent=0 // pred_check
    _
  $region11: #{tpu_custom_call.1} parent=0 // pred_check_branch
    %13 = sbr.rel (0) target = $region13
  $region12: #{tpu_custom_call.1} parent=0 // pred_region
    _
  $region13: #{tpu_custom_call.1} parent=0 // pred_fallthru
    _
  %v14 = vld [vmem:[%s1] sm:$0xff]
  %v15 = vld [vmem:[%s1 + $0x8] sm:$0x3]
  %v16 = vld [vmem:[%s2] sm:$0xff]
  %v17 = vld [vmem:[%s2 + $0x8] sm:$0x3]
  %v18 = vadd.f32 %v14, %v16
  %v19 = vadd.f32 %v15, %v17
  %v20 = vld [vmem:[%s0] sm:$0xff]
  %v21 = vld [vmem:[%s0 + $0x8] sm:$0x3]
  %vm22 = vcmask 80896
  %v24 = vsel %vm22, %v20, 0
  %v27 = vsel %vm22, %v21, 0
  %vm29 = vcmask 1041408
  %v31 = vsel %vm29, %v19, 0
  %33 = vmatprep.subr.mxu0 0.0
  %34 = vmatpush1.msra.mxu0 %v18
  %35 = vmatprep.subr.mxu0 0.0
  %36 = vmatpush1.msra.mxu0 %v31
  %37 = vmatprep.subr.mxu0 0.0
  %38 = vmatpush1.msra.mxu0 0.0
  %39 = vmatprep.subr.mxu0 0.0
  %40 = vmatpush1.msra.mxu0 0.0
  %41 = vmatprep.subr.mxu0 0.0
  %42 = vmatpush1.msra.mxu0 0.0
  %43 = vmatprep.subr.mxu0 0.0
  %44 = vmatpush1.msra.mxu0 0.0
  %45 = vmatprep.subr.mxu0 0.0
  %46 = vmatpush1.msra.mxu0 0.0
  %47 = vmatprep.subr.mxu0 0.0
  %48 = vmatpush1.msra.mxu0 0.0
  %49 = vmatprep.subr.mxu0 0.0
  %50 = vmatpush1.msra.mxu0 0.0
  %51 = vmatprep.subr.mxu0 0.0
  %52 = vmatpush1.msra.mxu0 0.0
  %53 = vmatprep.subr.mxu0 0.0
  %54 = vmatpush1.msra.mxu0 0.0
  %55 = vmatprep.subr.mxu0 0.0
  %56 = vmatpush1.msra.mxu0 0.0
  %57 = vmatprep.subr.mxu0 0.0
  %58 = vmatpush1.msra.mxu0 0.0
  %59 = vmatprep.subr.mxu0 0.0
  %60 = vmatpush1.msra.mxu0 0.0
  %61 = vmatprep.subr.mxu0 0.0
  %62 = vmatpush1.msra.mxu0 0.0
  %63 = vmatprep.subr.mxu0 0.0
  %64 = vmatpush1.msra.mxu0 0.0
  %65 = vmatprep.subr.mxu0 0.0
  %66 = vmatpush1.msra.mxu0 0.0
  %67 = vmatprep.subr.mxu0 0.0
  %68 = vmatpush1.msra.mxu0 0.0
  %69 = vmatprep.subr.mxu0 0.0
  %70 = vmatpush1.msra.mxu0 0.0
  %71 = vmatprep.subr.mxu0 0.0
  %72 = vmatpush1.msra.mxu0 0.0
  %73 = vmatprep.subr.mxu0 0.0
  %74 = vmatpush1.msra.mxu0 0.0
  %75 = vmatprep.subr.mxu0 0.0
  %76 = vmatpush1.msra.mxu0 0.0
  %77 = vmatprep.subr.mxu0 0.0
  %78 = vmatpush1.msra.mxu0 0.0
  %79 = vmatprep.subr.mxu0 0.0
  %80 = vmatpush1.msra.mxu0 0.0
  %81 = vmatprep.subr.mxu0 0.0
  %82 = vmatpush1.msra.mxu0 0.0
  %83 = vmatprep.subr.mxu0 0.0
  %84 = vmatpush1.msra.mxu0 0.0
  %85 = vmatprep.subr.mxu0 0.0
  %86 = vmatpush1.msra.mxu0 0.0
  %87 = vmatprep.subr.mxu0 0.0
  %88 = vmatpush1.msra.mxu0 0.0
  %89 = vmatprep.subr.mxu0 0.0
  %90 = vmatpush1.msra.mxu0 0.0
  %91 = vmatprep.subr.mxu0 0.0
  %92 = vmatpush1.msra.mxu0 0.0
  %93 = vmatprep.subr.mxu0 0.0
  %94 = vmatpush1.msra.mxu0 0.0
  %95 = vmatprep.subr.mxu0 0.0
  %96 = vmatpush1.msra.mxu0 0.0
  %97 = vmatprep.mubr.f32.mxu0 0.0
  %98 = vmatmul.mubr.f32.gmra.mrb[0].mxu0 %v24
  %v99 = vpop.f32.mrb[0].mxu0
  %v100 = vadd.f32 0.0, %v99
  %v101 = vpop.f32.mrb[0].mxu0
  %102 = vmatprep.mubr.f32.mxu0 0.0
  %103 = vmatmul.mubr.f32.gmra.mrb[0].mxu0 %v27
  %v104 = vpop.f32.mrb[0].mxu0
  %v105 = vadd.f32 0.0, %v104
  %v106 = vpop.f32.mrb[0].mxu0
  %107 = vdwg.mxu0
  %vm108 = vcmask 64512
  %109 = vst.msk [vmem:[%s3] sm:$0xff] %vm108, %v100
  %vm110 = vcmask 58368
  %111 = vst.msk [vmem:[%s3 + $0x8] sm:$0x3] %vm110, %v105
  // Predicated region
  $region14: #{tpu_custom_call.1} parent=0 // pred_check
    _
  $region15: #{tpu_custom_call.1} parent=0 // pred_check_branch
    %113 = sbr.rel (0) target = $region17
  $region16: #{tpu_custom_call.1} parent=0 // pred_region
    _
  $region17: #{tpu_custom_call.1} parent=0 // pred_fallthru
    _
  // Predicated region
  $region18: #{tpu_custom_call.1} parent=0 // pred_check
    _
  $region19: #{tpu_custom_call.1} parent=0 // pred_check_branch
    %115 = sbr.rel (0) target = $region21
  $region20: #{tpu_custom_call.1} parent=0 // pred_region
    _
  $region21: #{tpu_custom_call.1} parent=0 // pred_fallthru
    _

</llo_original>
